<compile_context>
chip_gen: v5e
topology: v5e:2x2
jax: 0.10.0
libtpu: 0.0.40
codegen_flags: <defaults>
</compile_context>

<pallas_src>
import functools

import jax
import jax.numpy as jnp
from jax import lax
from jax.experimental import pallas as pl
from jax.experimental.pallas import tpu as pltpu

_F32_BYTES = 4


def _vmem_capacity_bytes():
    """Physical per-core VMEM; conservative fallback (v7x: 64 MiB / TensorCore)."""
    try:
        cap = int(pltpu.get_tpu_info().vmem_capacity_bytes)
        if cap > 0:
            return cap
    except Exception:
        pass
    return 64 * 1024 * 1024


def _sublane_multiple(dtype):
    """Sublane packing multiple for the dtype's min tile (f32: 8, bf16: 16, int8: 32)."""
    return {4: 8, 2: 16, 1: 32}.get(jnp.dtype(dtype).itemsize, 8)


def _pick_tile(total, preferred, multiple):
    """Largest divisor of `total` that is <= preferred and a multiple of `multiple`.
    Falls back to the full extent, which is always a legal block dim."""
    best = None
    upper = min(total, preferred)
    t = multiple
    while t <= upper:
        if total % t == 0:
            best = t
        t += multiple
    return best if best is not None else total


def _choose_block_batch(batch, per_item_bytes, budget_bytes, other_steps,
                        min_total_steps=4):
    """Largest divisor of `batch` whose pipelined working set fits the budget while
    keeping >= min_total_steps total grid steps when the shape allows (>= 2 steps
    per TensorCore on 2-TC v7x, so prefetch/writeback stays overlapped per core)."""
    target_steps = min(min_total_steps, batch * other_steps)
    best = 1
    for bt in range(1, batch + 1):
        if batch % bt:
            continue
        if bt * per_item_bytes > budget_bytes:
            break
        if (batch // bt) * other_steps < target_steps:
            break
        best = bt
    return best


def _flash_attention_kernel(q_ref, k_ref, v_ref, out_ref, m_sc, l_sc, acc_sc,
                            *, inv_temperature):
    """Online-softmax attention; key axis is grid axis 2 ('arbitrary').

    q_ref/out_ref: (bt, tq, H); k_ref/v_ref: (bt, tkv, H);
    scratch m/l: (bt, tq, 1) f32, acc: (bt, tq, H) f32 (resident across kv steps).
    """
    kv_step = pl.program_id(2)

    @pl.when(kv_step == 0)
    def _():
        m_sc[...] = jnp.full_like(m_sc, -jnp.inf)
        l_sc[...] = jnp.zeros_like(l_sc)
        acc_sc[...] = jnp.zeros_like(acc_sc)

    # Fold 1/temperature into q (O(tq*H), not O(tq*tkv)); bf16 MXU operands with
    # f32 accumulation.  Contraction over last axes -> no k transpose (no XLU hop).
    q = (q_ref[...] * inv_temperature).astype(jnp.bfloat16)
    k = k_ref[...].astype(jnp.bfloat16)
    s = lax.dot_general(q, k,
                        dimension_numbers=(((2,), (2,)), ((0,), (0,))),
                        preferred_element_type=jnp.float32)

    m_prev = m_sc[...]
    m_new = jnp.maximum(m_prev, jnp.max(s, axis=-1, keepdims=True))
    alpha = jnp.exp(m_prev - m_new)
    p = jnp.exp(s - m_new)
    l_sc[...] = alpha * l_sc[...] + jnp.sum(p, axis=-1, keepdims=True)
    acc_sc[...] = alpha * acc_sc[...] + lax.dot_general(
        p.astype(jnp.bfloat16), v_ref[...].astype(jnp.bfloat16),
        dimension_numbers=(((2,), (1,)), ((0,), (0,))),
        preferred_element_type=jnp.float32)
    m_sc[...] = m_new

    @pl.when(kv_step == pl.num_programs(2) - 1)
    def _():
        # approx=True -> EUP vrcp slot (otherwise idle next to VPU/MXU); ~2^-12 rel err.
        inv_l = pl.reciprocal(l_sc[...], approx=True)
        out_ref[...] = (acc_sc[...] * inv_l).astype(out_ref.dtype)


def _full_attention_kernel(q_ref, k_ref, v_ref, out_ref, attn_ref,
                           *, inv_temperature):
    """Full-softmax attention that also materializes the attention matrix.

    q_ref/out_ref: (bt, tq, H); k_ref/v_ref: (bt, Sk, H); attn_ref: (bt, tq, Sk).
    """
    q = (q_ref[...] * inv_temperature).astype(jnp.bfloat16)
    k = k_ref[...].astype(jnp.bfloat16)
    s = lax.dot_general(q, k,
                        dimension_numbers=(((2,), (2,)), ((0,), (0,))),
                        preferred_element_type=jnp.float32)
    m = jnp.max(s, axis=-1, keepdims=True)
    e = jnp.exp(s - m)
    p = e * pl.reciprocal(jnp.sum(e, axis=-1, keepdims=True), approx=True)

    # Dropout(p=0.1) is identity at inference.
    # TODO(synk): training-mode attention dropout not implemented.
    attn_ref[...] = p.astype(attn_ref.dtype)
    out_ref[...] = lax.dot_general(
        p.astype(jnp.bfloat16), v_ref[...].astype(jnp.bfloat16),
        dimension_numbers=(((2,), (1,)), ((0,), (0,))),
        preferred_element_type=jnp.float32).astype(out_ref.dtype)


def attention(q, k, v, temperature, mask=None, return_attn=True,
              q_tile_hint=256, kv_tile_hint=512):
    """Scaled dot-product attention.  q: (B, Sq, H), k/v: (B, Sk, H).

    Returns (output, attn) per the implied PyTorch forward.  Pass
    return_attn=False to skip materializing the (B, Sq, Sk) attention matrix; that
    path runs a flash-style online-softmax kernel tiled over Sq and Sk (attn=None).
    """
    assert mask is None, "mask path not implemented"  # TODO(synk): optional mask support
    B, Sq, H = q.shape
    _, Sk, Hk = k.shape
    assert k.shape[0] == B and v.shape == k.shape and Hk == H
    assert k.dtype == q.dtype and v.dtype == q.dtype

    io_bytes = jnp.dtype(q.dtype).itemsize
    sub_mult = _sublane_multiple(q.dtype)
    inv_temperature = 1.0 / float(temperature)

    # Generation-aware VMEM budgeting (v5e/v6e: 128 MiB, v7x: 64 MiB per TC).
    vmem_cap = _vmem_capacity_bytes()
    vmem_limit = int(vmem_cap * 0.70)        # headroom for Mosaic internal scratch
    chooser_budget = int(vmem_limit * 0.80)  # headroom inside the limit

    # No HBM padding: last block dim is the full H (and full Sk for the attn output);
    # Sq/Sk tiles are exact divisors and sublane-multiples, else fall back to full.
    tq = _pick_tile(Sq, q_tile_hint, sub_mult)
    nq = Sq // tq

    flops = 4 * B * Sq * Sk * H              # two matmuls, 2 flops/MAC each
    common_bytes = io_bytes * B * (2 * Sq * H + 2 * Sk * H)

    if return_attn:
        # Full-softmax path: the attention matrix needs every key per query row, so
        # Sk is un-tiled; k/v blocks stay resident across the Sq grid axis (no re-DMA).
        # TODO(synk): very large Sk with return_attn=True may not fit VMEM; use the
        #             flash path (return_attn=False) for long sequences.
        per_item = (2 * io_bytes * (2 * tq * H + 2 * Sk * H)      # double-buffered q/k/v/out
                    + 2 * io_bytes * tq * Sk                       # attn tile DMA
                    + 4 * _F32_BYTES * tq * Sk                     # s/e/p f32 temporaries
                    + 2 * (tq * H + 2 * Sk * H + tq * Sk))         # bf16 operand copies
        bt = _choose_block_batch(B, per_item, chooser_budget, nq)
        grid = (B // bt, nq)
        kernel = functools.partial(_full_attention_kernel,
                                   inv_temperature=inv_temperature)
        out_shape = (jax.ShapeDtypeStruct((B, Sq, H), q.dtype),
                     jax.ShapeDtypeStruct((B, Sq, Sk), q.dtype))
        in_specs = [
            pl.BlockSpec((bt, tq, H), lambda b, qi: (b, qi, 0)),
            pl.BlockSpec((bt, Sk, H), lambda b, qi: (b, 0, 0)),
            pl.BlockSpec((bt, Sk, H), lambda b, qi: (b, 0, 0)),
        ]
        out_specs = (
            pl.BlockSpec((bt, tq, H), lambda b, qi: (b, qi, 0)),
            pl.BlockSpec((bt, tq, Sk), lambda b, qi: (b, qi, 0)),
        )
        scratch_shapes = ()
        dim_sem = ("parallel", "parallel")
        cost = pl.CostEstimate(flops=flops, transcendentals=B * Sq * Sk,
                               bytes_accessed=common_bytes + io_bytes * B * Sq * Sk)
    else:
        tkv = _pick_tile(Sk, kv_tile_hint, sub_mult)
        nkv = Sk // tkv
        per_item = (2 * io_bytes * (2 * tq * H + 2 * tkv * H)      # double-buffered q/k/v/out
                    + _F32_BYTES * (2 * tq + tq * H)               # m/l/acc scratch
                    + 4 * _F32_BYTES * tq * tkv                    # s/p f32 temporaries
                    + 2 * (tq * H + 2 * tkv * H + tq * tkv))       # bf16 operand copies
        bt = _choose_block_batch(B, per_item, chooser_budget, nq * nkv)
        grid = (B // bt, nq, nkv)
        kernel = functools.partial(_flash_attention_kernel,
                                   inv_temperature=inv_temperature)
        out_shape = (jax.ShapeDtypeStruct((B, Sq, H), q.dtype),)
        in_specs = [
            pl.BlockSpec((bt, tq, H), lambda b, qi, kv: (b, qi, 0)),
            pl.BlockSpec((bt, tkv, H), lambda b, qi, kv: (b, kv, 0)),
            pl.BlockSpec((bt, tkv, H), lambda b, qi, kv: (b, kv, 0)),
        ]
        out_specs = (pl.BlockSpec((bt, tq, H), lambda b, qi, kv: (b, qi, 0)),)
        scratch_shapes = (pltpu.VMEM((bt, tq, 1), jnp.float32),   # running max m
                          pltpu.VMEM((bt, tq, 1), jnp.float32),   # running denom l
                          pltpu.VMEM((bt, tq, H), jnp.float32))   # running acc
        dim_sem = ("parallel", "parallel", "arbitrary")
        cost = pl.CostEstimate(flops=flops, transcendentals=B * Sq * Sk,
                               bytes_accessed=common_bytes)

    results = pl.pallas_call(
        kernel,
        out_shape=out_shape,
        grid_spec=pltpu.PrefetchScalarGridSpec(
            num_scalar_prefetch=0,
            grid=grid,
            in_specs=in_specs,
            out_specs=out_specs,
            scratch_shapes=scratch_shapes,
        ),
        compiler_params=pltpu.CompilerParams(
            dimension_semantics=dim_sem,
            vmem_limit_bytes=vmem_limit),
        cost_estimate=cost,
    )(q, k, v)

    if return_attn:
        return results[0], results[1]
    return results[0], None


def init_params(hidden_size, key):
    """Deterministic init of the module's Linear layers (unused by stubbed forward)."""
    k1, k2, k3, k4 = jax.random.split(key, 4)
    bound_h = 1.0 / jnp.sqrt(hidden_size)
    return {
        "W_attn_h_w": jax.random.uniform(k1, (hidden_size, hidden_size),
                                         minval=-bound_h, maxval=bound_h),
        "W_attn_h_b": jax.random.uniform(k2, (hidden_size,),
                                         minval=-bound_h, maxval=bound_h),
        "W_attn_o_w": jax.random.uniform(k3, (1, hidden_size),
                                         minval=-bound_h, maxval=bound_h),
        "W_attn_o_b": jax.random.uniform(k4, (1,),
                                         minval=-bound_h, maxval=bound_h),
    }


if __name__ == "__main__":
    B, S, H = 2, 8, 32
    temperature = float(H) ** 0.5  # typical: sqrt(hidden_size)

    key = jax.random.PRNGKey(0)
    kq, kk, kv_, kparams, kq2, kk2, kv2 = jax.random.split(key, 7)
    q = jax.random.normal(kq, (B, S, H), dtype=jnp.float32)
    k = jax.random.normal(kk, (B, S, H), dtype=jnp.float32)
    v = jax.random.normal(kv_, (B, S, H), dtype=jnp.float32)

    _ = init_params(H, kparams)  # parameters exist per __init__; unused by stubbed forward

    # Full path (output + attention matrix, matching the implied forward signature).
    out, attn = attention(q, k, v, temperature, return_attn=True)
    jax.block_until_ready((out, attn))

    # Fast path: flash-style online softmax, no (B, Sq, Sk) writeback.
    out_only, _none = attention(q, k, v, temperature, return_attn=False)
    jax.block_until_ready(out_only)

    # Pure-JAX reference.  Tolerance loosened: bf16 MXU operands + approximate
    # EUP reciprocal in the kernel vs. full-f32 reference math.
    scores = jnp.einsum("bqh,bkh->bqk", q, k) / temperature
    attn_ref = jax.nn.softmax(scores, axis=2)
    out_ref = jnp.einsum("bqk,bkh->bqh", attn_ref, v)

    assert out.shape == (B, S, H) and attn.shape == (B, S, S)
    assert jnp.allclose(attn, attn_ref, atol=2e-2, rtol=2e-2)
    assert jnp.allclose(out, out_ref, atol=2e-2, rtol=2e-2)
    assert jnp.allclose(out_only, out_ref, atol=2e-2, rtol=2e-2)

    # Exercise the multi-step online-softmax path (nq=4, nkv=4) with small tile hints.
    S2 = 32
    q2 = jax.random.normal(kq2, (B, S2, H), dtype=jnp.float32)
    k2 = jax.random.normal(kk2, (B, S2, H), dtype=jnp.float32)
    v2 = jax.random.normal(kv2, (B, S2, H), dtype=jnp.float32)
    out2, _ = attention(q2, k2, v2, temperature, return_attn=False,
                        q_tile_hint=8, kv_tile_hint=8)
    jax.block_until_ready(out2)
    scores2 = jnp.einsum("bqh,bkh->bqk", q2, k2) / temperature
    out2_ref = jnp.einsum("bqk,bkh->bqh", jax.nn.softmax(scores2, axis=2), v2)
    assert jnp.allclose(out2, out2_ref, atol=2e-2, rtol=2e-2)

    print("KERNEL_OK")
</pallas_src>

<mosaic_0001>
module attributes {stable_mosaic.version = 11 : i64} {
  func.func @_full_attention_kernel(%arg0: i32, %arg1: i32, %arg2: memref<1x8x32xf32, #tpu.memory_space<vmem>>, %arg3: memref<1x8x32xf32, #tpu.memory_space<vmem>>, %arg4: memref<1x8x32xf32, #tpu.memory_space<vmem>>, %arg5: memref<1x8x32xf32, #tpu.memory_space<vmem>>, %arg6: memref<1x8x8xf32, #tpu.memory_space<vmem>>) attributes {dimension_semantics = [#tpu.dimension_semantics<parallel>, #tpu.dimension_semantics<parallel>], iteration_bounds = array<i64: 2, 1>, scalar_prefetch = 0 : i64, scratch_operands = 0 : i64, tpu.core_type = #tpu.core_type<tc>, window_params = [{transform_indices = @transform_0, window_bounds = array<i64: 1, 8, 32>}, {transform_indices = @transform_1, window_bounds = array<i64: 1, 8, 32>}, {transform_indices = @transform_2, window_bounds = array<i64: 1, 8, 32>}, {transform_indices = @transform_3, window_bounds = array<i64: 1, 8, 32>}, {transform_indices = @transform_4, window_bounds = array<i64: 1, 8, 8>}]} {
    %c0 = arith.constant 0 : index
    %c0_0 = arith.constant 0 : index
    %c0_1 = arith.constant 0 : index
    %0 = vector.load %arg2[%c0, %c0_0, %c0_1] : memref<1x8x32xf32, #tpu.memory_space<vmem>>, vector<1x8x32xf32>
    %cst = arith.constant 0.176776692 : f32
    %1 = vector.broadcast %cst : f32 to vector<1x8x32xf32>
    %2 = arith.mulf %0, %1 : vector<1x8x32xf32>
    %3 = arith.truncf %2 : vector<1x8x32xf32> to vector<1x8x32xbf16>
    %c0_2 = arith.constant 0 : index
    %c0_3 = arith.constant 0 : index
    %c0_4 = arith.constant 0 : index
    %4 = vector.load %arg3[%c0_2, %c0_3, %c0_4] : memref<1x8x32xf32, #tpu.memory_space<vmem>>, vector<1x8x32xf32>
    %5 = arith.truncf %4 : vector<1x8x32xf32> to vector<1x8x32xbf16>
    %cst_5 = arith.constant dense<0.000000e+00> : vector<1x8x8xf32>
    %6 = tpu.matmul %3, %5, %cst_5 {dimension_numbers = #tpu.dot_dimension_numbers<[2], [2], [1], [1], [0, 0, 0, 1, 1, 1], [0], [0]>} : vector<1x8x32xbf16>, vector<1x8x32xbf16>, vector<1x8x8xf32> -> vector<1x8x8xf32>
    %cst_6 = arith.constant dense<0xFF800000> : vector<1x8xf32>
    %7 = vector.multi_reduction <maximumf>, %6, %cst_6 [2] : vector<1x8x8xf32> to vector<1x8xf32>
    %8 = vector.shape_cast %7 : vector<1x8xf32> to vector<1x8x1xf32>
    %9 = vector.broadcast %8 : vector<1x8x1xf32> to vector<1x8x8xf32>
    %10 = arith.subf %6, %9 : vector<1x8x8xf32>
    %11 = math.exp %10 : vector<1x8x8xf32>
    %cst_7 = arith.constant dense<0.000000e+00> : vector<1x8xf32>
    %12 = vector.multi_reduction <add>, %11, %cst_7 [2] : vector<1x8x8xf32> to vector<1x8xf32>
    %13 = vector.shape_cast %12 : vector<1x8xf32> to vector<1x8x1xf32>
    %14 = tpu.reciprocal %13 {approx = true} : vector<1x8x1xf32> -> vector<1x8x1xf32>
    %15 = vector.broadcast %14 : vector<1x8x1xf32> to vector<1x8x8xf32>
    %16 = arith.mulf %11, %15 : vector<1x8x8xf32>
    %c0_8 = arith.constant 0 : index
    %c0_9 = arith.constant 0 : index
    %c0_10 = arith.constant 0 : index
    %17 = vector.load %arg6[%c0_8, %c0_9, %c0_10] : memref<1x8x8xf32, #tpu.memory_space<vmem>>, vector<1x8x8xf32>
    tpu.vector_store %arg6[%c0_8, %c0_9, %c0_10], %16 {strides = array<i32>} : memref<1x8x8xf32, #tpu.memory_space<vmem>>, vector<1x8x8xf32>,
    %18 = arith.truncf %16 : vector<1x8x8xf32> to vector<1x8x8xbf16>
    %c0_11 = arith.constant 0 : index
    %c0_12 = arith.constant 0 : index
    %c0_13 = arith.constant 0 : index
    %19 = vector.load %arg4[%c0_11, %c0_12, %c0_13] : memref<1x8x32xf32, #tpu.memory_space<vmem>>, vector<1x8x32xf32>
    %20 = arith.truncf %19 : vector<1x8x32xf32> to vector<1x8x32xbf16>
    %cst_14 = arith.constant dense<0.000000e+00> : vector<1x8x32xf32>
    %21 = tpu.matmul %18, %20, %cst_14 {dimension_numbers = #tpu.dot_dimension_numbers<[2], [1], [1], [2], [0, 0, 0, 1, 1, 2], [0], [0]>} : vector<1x8x8xbf16>, vector<1x8x32xbf16>, vector<1x8x32xf32> -> vector<1x8x32xf32>
    %c0_15 = arith.constant 0 : index
    %c0_16 = arith.constant 0 : index
    %c0_17 = arith.constant 0 : index
    %22 = vector.load %arg5[%c0_15, %c0_16, %c0_17] : memref<1x8x32xf32, #tpu.memory_space<vmem>>, vector<1x8x32xf32>
    tpu.vector_store %arg5[%c0_15, %c0_16, %c0_17], %21 {strides = array<i32>} : memref<1x8x32xf32, #tpu.memory_space<vmem>>, vector<1x8x32xf32>,
    return
  }
  func.func @transform_0(%arg0: i32, %arg1: i32) -> (i32, i32, i32) {
    %c0_i32 = arith.constant 0 : i32
    %c0_i32_0 = arith.constant 0 : i32
    return %arg0, %arg1, %c0_i32 : i32, i32, i32
  }
  func.func @transform_1(%arg0: i32, %arg1: i32) -> (i32, i32, i32) {
    %c0_i32 = arith.constant 0 : i32
    %c0_i32_0 = arith.constant 0 : i32
    %c0_i32_1 = arith.constant 0 : i32
    return %arg0, %c0_i32, %c0_i32_0 : i32, i32, i32
  }
  func.func @transform_2(%arg0: i32, %arg1: i32) -> (i32, i32, i32) {
    %c0_i32 = arith.constant 0 : i32
    %c0_i32_0 = arith.constant 0 : i32
    %c0_i32_1 = arith.constant 0 : i32
    return %arg0, %c0_i32, %c0_i32_0 : i32, i32, i32
  }
  func.func @transform_3(%arg0: i32, %arg1: i32) -> (i32, i32, i32) {
    %c0_i32 = arith.constant 0 : i32
    %c0_i32_0 = arith.constant 0 : i32
    return %arg0, %arg1, %c0_i32 : i32, i32, i32
  }
  func.func @transform_4(%arg0: i32, %arg1: i32) -> (i32, i32, i32) {
    %c0_i32 = arith.constant 0 : i32
    %c0_i32_0 = arith.constant 0 : i32
    return %arg0, %arg1, %c0_i32 : i32, i32, i32
  }
}

</mosaic_0001>

<llo_original>
// kernel: tpu_custom_call.1
$region0: #{tpu_custom_call.1}
  #allocation0 [shape = 'u32[]', space=smem, size = 0x4, offset = 0x4, fixed_abs, tag = 'smem constant byte address 0x4 - core index']
  #allocation1 [shape = 'u32[72,128]{1,0:T(1,128)}', space=vmem, size = 0x9000, scoped, tag = 'internal scratch']
  %s0 = inlined_call_operand.hbm [shape: f32[2,8,32], index: 0, kind: input, shape index: {}]
  %s1 = inlined_call_operand.hbm [shape: f32[2,8,32], index: 1, kind: input, shape index: {}]
  %s2 = inlined_call_operand.hbm [shape: f32[2,8,32], index: 2, kind: input, shape index: {}]
  %s3 = inlined_call_operand.hbm [shape: f32[2,8,32], index: 3, kind: output, shape index: {0}]
  %s4 = inlined_call_operand.hbm [shape: f32[2,8,8], index: 4, kind: output, shape index: {1}]
  %5 = xla_tuple %s3, %s4
  %s6 = sld [smem:[#allocation0]]
  $region65: #{tpu_custom_call.1} parent=0
    _
  %s8 = ssub.s32 1, %s6
  %s9 = scalar_select 0, %s8, %s6
  $region1: #{tpu_custom_call.1} parent=0
    #allocation2 [shape = 'u8[8192]{0}', space=vmem, size = 0x2000, scoped, tag = 'input window, operand 0']
    #allocation3 [shape = 's32[2]{0}', space=sflag, size = 0x8, scoped, tag = 'scoped memory for tpu_custom_call.1']
    #allocation4 [shape = 's32[2]{0}', space=sflag, size = 0x8, scoped, tag = 'scoped memory for tpu_custom_call.1']
    #allocation5 [shape = 'u8[8192]{0}', space=vmem, size = 0x2000, scoped, tag = 'input window, operand 1']
    #allocation6 [shape = 's32[2]{0}', space=sflag, size = 0x8, scoped, tag = 'scoped memory for tpu_custom_call.1']
    #allocation7 [shape = 'u8[8192]{0}', space=vmem, size = 0x2000, scoped, tag = 'input window, operand 2']
    #allocation8 [shape = 'u8[8192]{0}', space=vmem, size = 0x2000, scoped, tag = 'output window, operand 0']
    #allocation9 [shape = 'u8[8192]{0}', space=vmem, size = 0x2000, scoped, tag = 'output window, operand 1']
    #allocation10 [shape = 's32[2]{0}', space=sflag, size = 0x8, scoped, tag = 'scoped memory for tpu_custom_call.1']
    %10 = vsyncpa [#allocation3], 0
    %s11 = scalar_lea.sflag [#allocation3], 1
    %12 = vsyncpa %s11, 0
    %13 = vsyncpa [#allocation6], 0
    %s14 = scalar_lea.sflag [#allocation6], 1
    %15 = vsyncpa %s14, 0
    %16 = vsyncpa [#allocation4], 0
    %s17 = scalar_lea.sflag [#allocation4], 1
    %18 = vsyncpa %s17, 0
    %19 = vsyncpa [#allocation10], 0
    %s20 = scalar_lea.sflag [#allocation10], 1
    %21 = vsyncpa %s20, 0
    loop: start=0, step=1, limit=4
    $region2: #{tpu_custom_call.1} parent=1 // loop_pre_header
      _
    $region3: #{tpu_custom_call.1} parent=1 // loop_header
      %s23 = sphi 0, %s27
      %p24 = scmp.ge.s32.totalorder %s23, 4
      %s30 = sphi 0, %s42
      %s31 = sphi 0, %s38
      %s32 = sphi 0, %s30
      %s33 = sphi 0, %s31
      %s34 = sphi 0, %s32
      %s35 = sphi 0, %s33
      %s47 = sphi 0, %s49
      %s50 = sphi 0, %s47
      %s51 = sphi 0, %s50
      %s67 = sphi 0, %s51
      %s73 = sphi 0, %s75
      %s76 = sphi 0, %s73
      %s77 = sphi 0, %s76
      %s93 = sphi 0, %s77
      %s99 = sphi 0, %s101
      %s102 = sphi 0, %s99
      %s103 = sphi 0, %s102
      %s119 = sphi 0, %s103
      %s127 = sphi 0, %s129
      %s130 = sphi 0, %s127
      %s131 = sphi 0, %s130
      %s147 = sphi 0, %s131
      %s155 = sphi 0, %s157
      %s158 = sphi 0, %s155
      %s159 = sphi 0, %s158
      %s175 = sphi 0, %s159
    $region4: #{tpu_custom_call.1} parent=1 // loop_header_branch
      %26 = sbr.rel (%p24) target = $region8
    $region5: #{tpu_custom_call.1} parent=1 // loop_body
      %s28 = ssub.s32 %s23, 1
      %s29 = ssub.s32 %s23, 2
      %s36 = sadd.s32 1, %s31
      %p37 = scmp.ge.s32.totalorder %s36, 1
      %s38 = scalar_select %p37, 0, %s36
      %s39 = sadd.s32 1, %s30
      %s40 = scalar_select %p37, %s39, %s30
      %p41 = scmp.ge.s32.totalorder %s40, 2
      %s42 = scalar_select %p41, 0, %s40
      %s43 = ssub.s32 %s30, %s42
      %s44 = ssub.s32 %s31, %s38
      %s45 = sor.u32 %s43, %s44
      %p46 = scmp.eq.s32.totalorder %s45, 0
      %s48 = sadd.s32 %s47, 1
      %s49 = scalar_select %p46, %s47, %s48
      %p52 = pneg %p46
      %p53 = scmp.eq.s32.totalorder %s23, 1
      %p54 = por %p52, %p53
      %p55 = scmp.ne.s32.totalorder %s47, %s50
      %p56 = scmp.eq.s32.totalorder %s23, 0
      %p57 = por %p55, %p56
      %p58 = scmp.ne.s32.totalorder %s47, %s50
      %p59 = scmp.eq.s32.totalorder %s28, 1
      %p60 = por %p58, %p59
      %p61 = scmp.ne.s32.totalorder %s50, %s51
      %p62 = scmp.eq.s32.totalorder %s28, 0
      %p63 = por %p61, %p62
      %p64 = scmp.ne.s32.totalorder %s50, %s51
      %p65 = scmp.eq.s32.totalorder %s29, 1
      %p66 = por %p64, %p65
      %p68 = scmp.ne.s32.totalorder %s51, %s67
      %p69 = scmp.eq.s32.totalorder %s29, 0
      %p70 = por %p68, %p69
      %s71 = ssub.s32 %s30, %s42
      %p72 = scmp.eq.s32.totalorder %s71, 0
      %s74 = sadd.s32 %s73, 1
      %s75 = scalar_select %p72, %s73, %s74
      %p78 = pneg %p72
      %p79 = scmp.eq.s32.totalorder %s23, 1
      %p80 = por %p78, %p79
      %p81 = scmp.ne.s32.totalorder %s73, %s76
      %p82 = scmp.eq.s32.totalorder %s23, 0
      %p83 = por %p81, %p82
      %p84 = scmp.ne.s32.totalorder %s73, %s76
      %p85 = scmp.eq.s32.totalorder %s28, 1
      %p86 = por %p84, %p85
      %p87 = scmp.ne.s32.totalorder %s76, %s77
      %p88 = scmp.eq.s32.totalorder %s28, 0
      %p89 = por %p87, %p88
      %p90 = scmp.ne.s32.totalorder %s76, %s77
      %p91 = scmp.eq.s32.totalorder %s29, 1
      %p92 = por %p90, %p91
      %p94 = scmp.ne.s32.totalorder %s77, %s93
      %p95 = scmp.eq.s32.totalorder %s29, 0
      %p96 = por %p94, %p95
      %s97 = ssub.s32 %s30, %s42
      %p98 = scmp.eq.s32.totalorder %s97, 0
      %s100 = sadd.s32 %s99, 1
      %s101 = scalar_select %p98, %s99, %s100
      %p104 = pneg %p98
      %p105 = scmp.eq.s32.totalorder %s23, 1
      %p106 = por %p104, %p105
      %p107 = scmp.ne.s32.totalorder %s99, %s102
      %p108 = scmp.eq.s32.totalorder %s23, 0
      %p109 = por %p107, %p108
      %p110 = scmp.ne.s32.totalorder %s99, %s102
      %p111 = scmp.eq.s32.totalorder %s28, 1
      %p112 = por %p110, %p111
      %p113 = scmp.ne.s32.totalorder %s102, %s103
      %p114 = scmp.eq.s32.totalorder %s28, 0
      %p115 = por %p113, %p114
      %p116 = scmp.ne.s32.totalorder %s102, %s103
      %p117 = scmp.eq.s32.totalorder %s29, 1
      %p118 = por %p116, %p117
      %p120 = scmp.ne.s32.totalorder %s103, %s119
      %p121 = scmp.eq.s32.totalorder %s29, 0
      %p122 = por %p120, %p121
      %s123 = ssub.s32 %s30, %s42
      %s124 = ssub.s32 %s31, %s38
      %s125 = sor.u32 %s123, %s124
      %p126 = scmp.eq.s32.totalorder %s125, 0
      %s128 = sadd.s32 %s127, 1
      %s129 = scalar_select %p126, %s127, %s128
      %p132 = pneg %p126
      %p133 = scmp.eq.s32.totalorder %s23, 1
      %p134 = por %p132, %p133
      %p135 = scmp.ne.s32.totalorder %s127, %s130
      %p136 = scmp.eq.s32.totalorder %s23, 0
      %p137 = por %p135, %p136
      %p138 = scmp.ne.s32.totalorder %s127, %s130
      %p139 = scmp.eq.s32.totalorder %s28, 1
      %p140 = por %p138, %p139
      %p141 = scmp.ne.s32.totalorder %s130, %s131
      %p142 = scmp.eq.s32.totalorder %s28, 0
      %p143 = por %p141, %p142
      %p144 = scmp.ne.s32.totalorder %s130, %s131
      %p145 = scmp.eq.s32.totalorder %s29, 1
      %p146 = por %p144, %p145
      %p148 = scmp.ne.s32.totalorder %s131, %s147
      %p149 = scmp.eq.s32.totalorder %s29, 0
      %p150 = por %p148, %p149
      %s151 = ssub.s32 %s30, %s42
      %s152 = ssub.s32 %s31, %s38
      %s153 = sor.u32 %s151, %s152
      %p154 = scmp.eq.s32.totalorder %s153, 0
      %s156 = sadd.s32 %s155, 1
      %s157 = scalar_select %p154, %s155, %s156
      %p160 = pneg %p154
      %p161 = scmp.eq.s32.totalorder %s23, 1
      %p162 = por %p160, %p161
      %p163 = scmp.ne.s32.totalorder %s155, %s158
      %p164 = scmp.eq.s32.totalorder %s23, 0
      %p165 = por %p163, %p164
      %p166 = scmp.ne.s32.totalorder %s155, %s158
      %p167 = scmp.eq.s32.totalorder %s28, 1
      %p168 = por %p166, %p167
      %p169 = scmp.ne.s32.totalorder %s158, %s159
      %p170 = scmp.eq.s32.totalorder %s28, 0
      %p171 = por %p169, %p170
      %p172 = scmp.ne.s32.totalorder %s158, %s159
      %p173 = scmp.eq.s32.totalorder %s29, 1
      %p174 = por %p172, %p173
      %p176 = scmp.ne.s32.totalorder %s159, %s175
      %p177 = scmp.eq.s32.totalorder %s29, 0
      %p178 = por %p176, %p177
      %p179 = scmp.le.s32.totalorder 1, %s23
      %p180 = scmp.lt.s32.totalorder %s23, 3
      %p181 = pnand %p179, %p180
      %p182 = pneg %p181
      // Predicated region
      $region9: #{tpu_custom_call.1} parent=5 // pred_check
        _
      $region10: #{tpu_custom_call.1} parent=5 // pred_check_branch
        %184 = sbr.rel (%p181) target = $region12
      $region11: #{tpu_custom_call.1} parent=5 // pred_region
        %s185 = ssub.s32 %s23, 1
      $region12: #{tpu_custom_call.1} parent=5 // pred_fallthru
        _
      %p186 = scmp.lt.s32.totalorder %s23, 2
      // Predicated region
      $region13: #{tpu_custom_call.1} parent=5 // pred_check
        %p187 = pneg %p186
      $region14: #{tpu_custom_call.1} parent=5 // pred_check_branch
        %189 = sbr.rel (%p187) target = $region16
      $region15: #{tpu_custom_call.1} parent=5 // pred_region
        // Predicated region
        $region17: #{tpu_custom_call.1} parent=15 // pred_check
          %p190 = pneg %p57
        $region18: #{tpu_custom_call.1} parent=15 // pred_check_branch
          %192 = sbr.rel (%p190) target = $region20
        $region19: #{tpu_custom_call.1} parent=15 // pred_region
          %s193 = sand.u32 %s47, 1
          %s194 = scalar_lea.sflag [#allocation3], %s193
          %s195 = sand.u32 %s47, 1
          %s196 = smul.addr %s195, 8
          %s197 = scalar_lea.vmem [#allocation2], %s196
          %199 = vsyncadd %s194, 0
          %s200 = sadd.s32 %s31, %s30
          %s201 = smul.addr %s200, 8
          %s202 = scalar_lea.hbm %s0, %s201
          %s204 = sshll.u32 %s202, 4
          %s205 = int_to_ptr.hbm [resolvable:$true] %s204
          %s206 = sshll.u32 %s197, 4
          %s207 = int_to_ptr.vmem [resolvable:$true] %s206
          %209 = dma.hbm_to_vmem [thread:$0]  %s205, 128, %s207, %s194
        $region20: #{tpu_custom_call.1} parent=15 // pred_fallthru
          _
        // Predicated region
        $region21: #{tpu_custom_call.1} parent=15 // pred_check
          %p210 = pneg %p83
        $region22: #{tpu_custom_call.1} parent=15 // pred_check_branch
          %212 = sbr.rel (%p210) target = $region24
        $region23: #{tpu_custom_call.1} parent=15 // pred_region
          %s213 = sand.u32 %s23, 1
          %s214 = scalar_lea.sflag [#allocation6], %s213
          %s215 = sand.u32 %s73, 1
          %s216 = smul.addr %s215, 8
          %s217 = scalar_lea.vmem [#allocation5], %s216
          %219 = vsyncadd %s214, 0
          %s220 = smul.addr %s30, 8
          %s221 = scalar_lea.hbm %s1, %s220
          %s223 = sshll.u32 %s221, 4
          %s224 = int_to_ptr.hbm [resolvable:$true] %s223
          %s225 = sshll.u32 %s217, 4
          %s226 = int_to_ptr.vmem [resolvable:$true] %s225
          %228 = dma.hbm_to_vmem [thread:$0]  %s224, 128, %s226, %s214
        $region24: #{tpu_custom_call.1} parent=15 // pred_fallthru
          _
        // Predicated region
        $region25: #{tpu_custom_call.1} parent=15 // pred_check
          %p229 = pneg %p109
        $region26: #{tpu_custom_call.1} parent=15 // pred_check_branch
          %231 = sbr.rel (%p229) target = $region28
        $region27: #{tpu_custom_call.1} parent=15 // pred_region
          %s232 = sand.u32 %s23, 1
          %s233 = scalar_lea.sflag [#allocation6], %s232
          %s234 = sand.u32 %s99, 1
          %s235 = smul.addr %s234, 8
          %s236 = scalar_lea.vmem [#allocation7], %s235
          %238 = vsyncadd %s233, 0
          %s239 = smul.addr %s30, 8
          %s240 = scalar_lea.hbm %s2, %s239
          %s242 = sshll.u32 %s240, 4
          %s243 = int_to_ptr.hbm [resolvable:$true] %s242
          %s244 = sshll.u32 %s236, 4
          %s245 = int_to_ptr.vmem [resolvable:$true] %s244
          %247 = dma.hbm_to_vmem [thread:$0]  %s243, 128, %s245, %s233
        $region28: #{tpu_custom_call.1} parent=15 // pred_fallthru
          _
      $region16: #{tpu_custom_call.1} parent=5 // pred_fallthru
        _
      %p248 = scmp.le.s32.totalorder 1, %s23
      %p249 = scmp.lt.s32.totalorder %s23, 3
      %p250 = pnand %p248, %p249
      %p251 = pneg %p250
      // Predicated region
      $region29: #{tpu_custom_call.1} parent=5 // pred_check
        _
      $region30: #{tpu_custom_call.1} parent=5 // pred_check_branch
        %253 = sbr.rel (%p250) target = $region32
      $region31: #{tpu_custom_call.1} parent=5 // pred_region
        %s254 = ssub.s32 %s23, 1
        %s255 = sand.u32 %s50, 1
        %s256 = scalar_lea.sflag [#allocation3], %s255
        %s257 = sand.u32 %s50, 1
        %s258 = smul.addr %s257, 8
        %s259 = scalar_lea.vmem [#allocation2], %s258
        // Predicated region
        $region33: #{tpu_custom_call.1} parent=31 // pred_check
          %p260 = pneg %p63
        $region34: #{tpu_custom_call.1} parent=31 // pred_check_branch
          %262 = sbr.rel (%p260) target = $region36
        $region35: #{tpu_custom_call.1} parent=31 // pred_region
          %264 = dma.done %s256, 128
        $region36: #{tpu_custom_call.1} parent=31 // pred_fallthru
          _
        %s265 = sand.u32 %s28, 1
        %s266 = scalar_lea.sflag [#allocation6], %s265
        %s267 = sand.u32 %s76, 1
        %s268 = smul.addr %s267, 8
        %s269 = scalar_lea.vmem [#allocation5], %s268
        // Predicated region
        $region37: #{tpu_custom_call.1} parent=31 // pred_check
          %p270 = pneg %p89
        $region38: #{tpu_custom_call.1} parent=31 // pred_check_branch
          %272 = sbr.rel (%p270) target = $region40
        $region39: #{tpu_custom_call.1} parent=31 // pred_region
          %274 = dma.done %s266, 128
        $region40: #{tpu_custom_call.1} parent=31 // pred_fallthru
          _
        %s275 = sand.u32 %s28, 1
        %s276 = scalar_lea.sflag [#allocation6], %s275
        %s277 = sand.u32 %s102, 1
        %s278 = smul.addr %s277, 8
        %s279 = scalar_lea.vmem [#allocation7], %s278
        // Predicated region
        $region41: #{tpu_custom_call.1} parent=31 // pred_check
          %p280 = pneg %p115
        $region42: #{tpu_custom_call.1} parent=31 // pred_check_branch
          %282 = sbr.rel (%p280) target = $region44
        $region43: #{tpu_custom_call.1} parent=31 // pred_region
          %284 = dma.done %s276, 128
        $region44: #{tpu_custom_call.1} parent=31 // pred_fallthru
          _
        %s285 = sand.u32 %s50, 1
        %s286 = scalar_lea.sflag [#allocation3], %s285
        %s287 = sand.u32 %s50, 1
        %s288 = smul.addr %s287, 8
        %s289 = scalar_lea.vmem [#allocation2], %s288
        %p290 = pneg %p63
        %p291 = pneg %p60
        %s292 = sand.u32 %s28, 1
        %s293 = scalar_lea.sflag [#allocation6], %s292
        %s294 = sand.u32 %s76, 1
        %s295 = smul.addr %s294, 8
        %s296 = scalar_lea.vmem [#allocation5], %s295
        %p297 = pneg %p89
        %p298 = pneg %p86
        %s299 = sand.u32 %s28, 1
        %s300 = scalar_lea.sflag [#allocation6], %s299
        %s301 = sand.u32 %s102, 1
        %s302 = smul.addr %s301, 8
        %s303 = scalar_lea.vmem [#allocation7], %s302
        %p304 = pneg %p115
        %p305 = pneg %p112
        %p306 = pneg %p143
        %p307 = pneg %p140
        %s308 = sand.u32 %s130, 1
        %s309 = scalar_lea.sflag [#allocation4], %s308
        %s310 = sand.u32 %s130, 1
        %s311 = smul.addr %s310, 8
        %s312 = scalar_lea.vmem [#allocation8], %s311
        %p313 = pneg %p171
        %p314 = pneg %p168
        %s315 = sand.u32 %s158, 1
        %s316 = scalar_lea.sflag [#allocation10], %s315
        %s317 = sand.u32 %s158, 1
        %s318 = smul.addr %s317, 8
        %s319 = scalar_lea.vmem [#allocation9], %s318
        %v321 = vld [vmem:[%s259] sm:$0xff]
        %v322 = vmul.f32 %v321, 0.17677669
        %v323 = vpack.c.bf16 %v322, %v322
        %v324 = vld [vmem:[%s269] sm:$0xff]
        %v325 = vpack.c.bf16 %v324, %v324
        %vm326 = vcmask 261120
        %v328 = vsel %vm326, %v323, 0
        %v331 = vsel %vm326, %v325, 0
        %333 = vmatpush.bf16.xpose.msra.mxu0 0
        %334 = vmatpush.bf16.xpose.msra.mxu0 0
        %335 = vmatpush.bf16.xpose.msra.mxu0 0
        %336 = vmatpush.bf16.xpose.msra.mxu0 0
        %337 = vmatpush.bf16.xpose.msra.mxu0 0
        %338 = vmatpush.bf16.xpose.msra.mxu0 0
        %339 = vmatpush.bf16.xpose.msra.mxu0 0
        %340 = vmatpush.bf16.xpose.msra.mxu0 %v331
        %341 = vmatmul.bf16.gmra.mxu0 %v328
        %v342 = vpop.f32.mrf.mxu0
        %v343 = vadd.f32 0.0, %v342
        %v344 = vpop.f32.mrf.mxu0
        %345 = vdwg.mxu0
        %vm346 = vcmask 64512
        %v347 = vsel %vm346, %v343, -inf
        %348 = vmax.xlane.f32.xlu0 %v347
        %v349 = vpop.xlane.xlu0 %348
        %v350 = vsub.f32 %v343, %v349
        %v351 = vmul.f32 %v350, 1.442695
        %v352 = vpow.pop %v351
        %v353 = vsel %vm346, %v352, 0.0
        %354 = vadd.xlane.f32.xlu0 %v353
        %v355 = vpop.xlane.xlu0 %354
        %v356 = vrcp.pop %v355
        %v357 = vmul.f32 %v352, %v356
        %358 = vst.msk [vmem:[%s319] sm:$0xff] %vm346, %v357
        %v359 = vpack.c.bf16 %v357, %v357
        %v360 = vld [vmem:[%s279] sm:$0xff]
        %v361 = vpack.c.bf16 %v360, %v360
        %v363 = vsel %vm346, %v359, 0
        %vm365 = vcmask 1043456
        %v367 = vsel %vm365, %v361, 0
        %369 = vmatpush.bf16.msra.mxu0 0
        %370 = vmatpush.bf16.msra.mxu0 0
        %371 = vmatpush.bf16.msra.mxu0 0
        %372 = vmatpush.bf16.msra.mxu0 0
        %373 = vmatpush.bf16.msra.mxu0 0
        %374 = vmatpush.bf16.msra.mxu0 0
        %375 = vmatpush.bf16.msra.mxu0 0
        %376 = vmatpush.bf16.msra.mxu0 %v367
        %377 = vmatmul.bf16.gmra.mxu0 %v363
        %v378 = vpop.f32.mrf.mxu0
        %v379 = vadd.f32 0.0, %v378
        %v380 = vpop.f32.mrf.mxu0
        %381 = vdwg.mxu0
        %382 = vst.msk [vmem:[%s312] sm:$0xff] %vm326, %v379
        %s383 = sand.u32 %s130, 1
        %s384 = scalar_lea.sflag [#allocation4], %s383
        %s385 = sand.u32 %s130, 1
        %s386 = smul.addr %s385, 8
        %s387 = scalar_lea.vmem [#allocation8], %s386
        %s388 = sand.u32 %s158, 1
        %s389 = scalar_lea.sflag [#allocation10], %s388
        %s390 = sand.u32 %s158, 1
        %s391 = smul.addr %s390, 8
        %s392 = scalar_lea.vmem [#allocation9], %s391
        // Predicated region
        $region45: #{tpu_custom_call.1} parent=31 // pred_check
          %p393 = pneg %p140
        $region46: #{tpu_custom_call.1} parent=31 // pred_check_branch
          %395 = sbr.rel (%p393) target = $region48
        $region47: #{tpu_custom_call.1} parent=31 // pred_region
          %397 = vsyncadd %s384, 0
          %s398 = sadd.s32 %s33, %s32
          %s399 = smul.addr %s398, 8
          %s400 = scalar_lea.hbm %s3, %s399
          %s402 = sshll.u32 %s387, 4
          %s403 = int_to_ptr.vmem [resolvable:$true] %s402
          %s404 = sshll.u32 %s400, 4
          %s405 = int_to_ptr.hbm [resolvable:$true] %s404
          %407 = dma.vmem_to_hbm [thread:$0]  %s403, 128, %s405, %s384
        $region48: #{tpu_custom_call.1} parent=31 // pred_fallthru
          _
        // Predicated region
        $region49: #{tpu_custom_call.1} parent=31 // pred_check
          %p408 = pneg %p168
        $region50: #{tpu_custom_call.1} parent=31 // pred_check_branch
          %410 = sbr.rel (%p408) target = $region52
        $region51: #{tpu_custom_call.1} parent=31 // pred_region
          %412 = vsyncadd %s389, 0
          %s413 = sadd.s32 %s33, %s32
          %s414 = smul.addr %s413, 8
          %s415 = scalar_lea.hbm %s4, %s414
          %s417 = sshll.u32 %s392, 4
          %s418 = int_to_ptr.vmem [resolvable:$true] %s417
          %s419 = sshll.u32 %s415, 4
          %s420 = int_to_ptr.hbm [resolvable:$true] %s419
          %422 = dma.vmem_to_hbm [thread:$0]  %s418, 128, %s420, %s389
        $region52: #{tpu_custom_call.1} parent=31 // pred_fallthru
          _
      $region32: #{tpu_custom_call.1} parent=5 // pred_fallthru
        _
      %p423 = scmp.le.s32.totalorder 2, %s23
      // Predicated region
      $region53: #{tpu_custom_call.1} parent=5 // pred_check
        %p424 = pneg %p423
      $region54: #{tpu_custom_call.1} parent=5 // pred_check_branch
        %426 = sbr.rel (%p424) target = $region56
      $region55: #{tpu_custom_call.1} parent=5 // pred_region
        %s427 = ssub.s32 %s23, 2
        // Predicated region
        $region57: #{tpu_custom_call.1} parent=55 // pred_check
          %p428 = pneg %p146
        $region58: #{tpu_custom_call.1} parent=55 // pred_check_branch
          %430 = sbr.rel (%p428) target = $region60
        $region59: #{tpu_custom_call.1} parent=55 // pred_region
          %s431 = sand.u32 %s131, 1
          %s432 = scalar_lea.sflag [#allocation4], %s431
          %s433 = sand.u32 %s131, 1
          %s434 = smul.addr %s433, 8
          %s435 = scalar_lea.vmem [#allocation8], %s434
          %437 = dma.done %s432, 128
        $region60: #{tpu_custom_call.1} parent=55 // pred_fallthru
          _
        // Predicated region
        $region61: #{tpu_custom_call.1} parent=55 // pred_check
          %p438 = pneg %p174
        $region62: #{tpu_custom_call.1} parent=55 // pred_check_branch
          %440 = sbr.rel (%p438) target = $region64
        $region63: #{tpu_custom_call.1} parent=55 // pred_region
          %s441 = sand.u32 %s159, 1
          %s442 = scalar_lea.sflag [#allocation10], %s441
          %s443 = sand.u32 %s159, 1
          %s444 = smul.addr %s443, 8
          %s445 = scalar_lea.vmem [#allocation9], %s444
          %447 = dma.done %s442, 128
        $region64: #{tpu_custom_call.1} parent=55 // pred_fallthru
          _
      $region56: #{tpu_custom_call.1} parent=5 // pred_fallthru
        _
    $region6: #{tpu_custom_call.1} parent=1 // loop_footer
      %s27 = sadd.s32 1, %s23
    $region7: #{tpu_custom_call.1} parent=1 // loop_footer_branch
      %22 = sbr.rel target = $region3
    $region8: #{tpu_custom_call.1} parent=1 // loop_exit
      _
    %448 = vsyncpa [#allocation3], 1
    %s449 = scalar_lea.sflag [#allocation3], 1
    %450 = vsyncpa %s449, 1
    %451 = vsyncpa [#allocation6], 1
    %s452 = scalar_lea.sflag [#allocation6], 1
    %453 = vsyncpa %s452, 1
    %454 = vsyncpa [#allocation4], 1
    %s455 = scalar_lea.sflag [#allocation4], 1
    %456 = vsyncpa %s455, 1
    %457 = vsyncpa [#allocation10], 1
    %s458 = scalar_lea.sflag [#allocation10], 1
    %459 = vsyncpa %s458, 1

</llo_original>
